<compile_context>
chip_gen: v5e
topology: v5e:2x2
jax: 0.10.0
libtpu: 0.0.40
codegen_flags: <defaults>
</compile_context>

<pallas_src>
import functools

import numpy as np
import jax
import jax.numpy as jnp
from jax.experimental import pallas as pl
from jax.experimental.pallas import tpu as pltpu

INPUT_DIM = 15
H_DIM = 8
Z_DIM = 2

LANES = 128
X_ROWS = 16                       # input features padded to a full sublane tile
OUT_ROWS = 20                     # recon (16, padded) | head (4)  -> both aligned
HEAD_OFF = 16                     # out rows 16:18 = mu, 18:20 = log_var

# Fused layer dims in torch layout (out_features, in_features).
# Layer 4 is the fused [fc_mu ; fc_log_var] head.
FUSED_DIMS = (
    (INPUT_DIM, INPUT_DIM),   # enc1
    (INPUT_DIM, INPUT_DIM),   # enc2
    (H_DIM, INPUT_DIM),       # enc3
    (H_DIM, H_DIM),           # enc4
    (2 * Z_DIM, H_DIM),       # fc_mu ++ fc_log_var
    (H_DIM, Z_DIM),           # dec1
    (H_DIM, H_DIM),           # dec2
    (INPUT_DIM, H_DIM),       # dec3
    (INPUT_DIM, INPUT_DIM),   # dec4
)
# Row offsets of each weight inside the packed slab (each block padded to 8/16 rows).
W_OFFS = (0, 16, 32, 40, 48, 56, 64, 72, 88)
BIAS_OFF = 104                # biases live in rows [104:120); bias of layer j = column j
SLAB_ROWS = 120               # (120, 128) f32 slab  ~60 KiB -> one resident DMA
FUSED_FLOP_SUM = sum(o * i for o, i in FUSED_DIMS)   # MACs per sample


def _vae_kernel(p_ref, x_ref, eps_ref, out_ref):
    """Whole VAE forward, feature-major: activations are (features, batch_block)."""
    f32 = jnp.float32
    bf16 = jnp.bfloat16

    def layer(idx, h, out_d=None):
        if out_d is None:
            out_d = FUSED_DIMS[idx][0]
        in_d = h.shape[0]                                    # slab cols past the true
        off = W_OFFS[idx]                                    # in_dim are zero-padded
        w = p_ref[off:off + out_d, 0:in_d].astype(bf16)
        b = p_ref[BIAS_OFF:BIAS_OFF + out_d, idx:idx + 1]    # (out,1) -> bcast over lanes
        return jnp.dot(w, h.astype(bf16), preferred_element_type=f32) + b

    def relu(v):
        return jnp.maximum(v, 0.0)

    # ---- encoder ----
    h = x_ref[...]                                   # bf16 (16, Bblk), row 15 is zero pad
    h = relu(layer(0, h))
    h = relu(layer(1, h))
    h = relu(layer(2, h))
    h = relu(layer(3, h))
    head = layer(4, h)                               # (4, Bblk): rows 0:2 mu, 2:4 log_var
    mu = head[0:Z_DIM, :]
    log_var = head[Z_DIM:2 * Z_DIM, :]

    # ---- reparameterize: z = mu + eps * exp(0.5 * log_var) ----
    z = mu + eps_ref[...].astype(f32) * jnp.exp(0.5 * log_var)

    # ---- decoder ----
    h = relu(layer(5, z))
    h = relu(layer(6, h))
    h = relu(layer(7, h))
    logits = layer(8, h, out_d=16)                   # row 15 is zero-weight padding
    # sigmoid(x) == 0.5 * tanh(0.5 * x) + 0.5  (exact identity, runs on the EUP)
    recon = 0.5 * jnp.tanh(0.5 * logits) + 0.5       # (16, Bblk)

    # two direct, sublane-aligned stores (no concatenate / relayout)
    out_ref[0:16, :] = recon.astype(out_ref.dtype)
    out_ref[16:OUT_ROWS, :] = head.astype(out_ref.dtype)


# -----------------------------------------------------------------------------
# Parameter handling
# -----------------------------------------------------------------------------
def init_params(key):
    """Torch-layout params [(W(out,in), b(out,))] mimicking nn.Linear default init."""
    dims = [  # (out_features, in_features) for the 10 original layers
        (INPUT_DIM, INPUT_DIM), (INPUT_DIM, INPUT_DIM), (H_DIM, INPUT_DIM), (H_DIM, H_DIM),
        (Z_DIM, H_DIM), (Z_DIM, H_DIM),
        (H_DIM, Z_DIM), (H_DIM, H_DIM), (INPUT_DIM, H_DIM), (INPUT_DIM, INPUT_DIM),
    ]
    params = []
    for (fan_out, fan_in) in dims:
        key, kw, kb = jax.random.split(key, 3)
        bound = 1.0 / float(np.sqrt(fan_in))
        w = jax.random.uniform(kw, (fan_out, fan_in), jnp.float32, -bound, bound)
        b = jax.random.uniform(kb, (fan_out,), jnp.float32, -bound, bound)
        params.append((w, b))
    return params


def pack_params(params):
    """Pack all weights/biases (fusing fc_mu/fc_log_var) into one (120, 128) slab."""
    fused = [
        params[0], params[1], params[2], params[3],
        (jnp.concatenate([params[4][0], params[5][0]], axis=0),
         jnp.concatenate([params[4][1], params[5][1]], axis=0)),
        params[6], params[7], params[8], params[9],
    ]
    slab = np.zeros((SLAB_ROWS, LANES), np.float32)
    for idx, (w, b) in enumerate(fused):
        out_d, in_d = FUSED_DIMS[idx]
        off = W_OFFS[idx]
        slab[off:off + out_d, 0:in_d] = np.asarray(w, np.float32)
        slab[BIAS_OFF:BIAS_OFF + out_d, idx] = np.asarray(b, np.float32)
    return jnp.asarray(slab)


# -----------------------------------------------------------------------------
# Wrapper
# -----------------------------------------------------------------------------
def _round_up(n, m):
    return ((n + m - 1) // m) * m


def _ceil_div(a, b):
    return -(-a // b)


def _choose_block(batch, max_block):
    """Pick (batch_block, padded_batch): big blocks, grid>=2 when possible,
    bounded padding waste."""
    pb_min = _round_up(max(batch, 1), LANES)
    if pb_min <= 2 * LANES:
        bb = LANES
    else:
        n_steps = max(2, _ceil_div(pb_min, max_block))      # >=2 steps -> both TCs on v7x
        bb = _round_up(_ceil_div(pb_min, n_steps), LANES)   # adaptive: bound padding waste
    n_steps = _ceil_div(pb_min, bb)
    return bb, bb * n_steps


@functools.partial(jax.jit, static_argnames=("block_b",))
def vae_forward(x, eps, packed_params, block_b=4096):
    """x: (B, INPUT_DIM), eps: (B, Z_DIM) -> (mu, log_var, reconstruction)."""
    assert block_b % LANES == 0 and block_b >= LANES, "block_b must be a multiple of 128"
    B = x.shape[0]
    bb, pb = _choose_block(B, block_b)
    grid = (pb // bb,)

    # feature-major (batch-on-lanes) bf16 layout, zero-padded to the padded batch
    xt = jnp.pad(jnp.transpose(x).astype(jnp.bfloat16),
                 ((0, X_ROWS - INPUT_DIM), (0, pb - B)))
    et = jnp.pad(jnp.transpose(eps).astype(jnp.bfloat16),
                 ((0, 0), (0, pb - B)))

    out = pl.pallas_call(
        _vae_kernel,
        out_shape=jax.ShapeDtypeStruct((OUT_ROWS, pb), jnp.bfloat16),
        grid=grid,
        in_specs=[
            # parameter slab: full array, same block every step -> stays resident
            pl.BlockSpec((SLAB_ROWS, LANES), lambda i: (0, 0)),
            pl.BlockSpec((X_ROWS, bb), lambda i: (0, i)),
            pl.BlockSpec((Z_DIM, bb), lambda i: (0, i)),
        ],
        out_specs=pl.BlockSpec((OUT_ROWS, bb), lambda i: (0, i)),
        compiler_params=pltpu.CompilerParams(
            dimension_semantics=("parallel",)),
        cost_estimate=pl.CostEstimate(
            flops=2 * pb * FUSED_FLOP_SUM,
            transcendentals=pb * (Z_DIM + 16),
            bytes_accessed=4 * SLAB_ROWS * LANES
                           + 2 * (X_ROWS + Z_DIM + OUT_ROWS) * pb),
    )(packed_params, xt, et)

    # single transpose + cast pass, then cheap column slices
    out_t = jnp.transpose(out[:, :B]).astype(jnp.float32)        # (B, OUT_ROWS)
    recon = out_t[:, 0:INPUT_DIM]
    mu = out_t[:, HEAD_OFF:HEAD_OFF + Z_DIM]
    log_var = out_t[:, HEAD_OFF + Z_DIM:HEAD_OFF + 2 * Z_DIM]
    return mu, log_var, recon


# -----------------------------------------------------------------------------
# Pure-JAX reference (torch semantics) for correctness checking
# -----------------------------------------------------------------------------
def vae_reference(x, eps, params):
    hp = jax.lax.Precision.HIGHEST

    def lin(h, wb):
        w, b = wb
        return jnp.dot(h, w.T, precision=hp) + b

    h = x
    for i in range(4):
        h = jax.nn.relu(lin(h, params[i]))
    mu = lin(h, params[4])
    log_var = lin(h, params[5])
    z = mu + eps * jnp.exp(0.5 * log_var)
    h = jax.nn.relu(lin(z, params[6]))
    h = jax.nn.relu(lin(h, params[7]))
    h = jax.nn.relu(lin(h, params[8]))
    recon = jax.nn.sigmoid(lin(h, params[9]))
    return mu, log_var, recon


def _check(batch, params, packed, k_x, k_eps, rtol=3e-2, atol=3e-2):
    x = jax.random.normal(k_x, (batch, INPUT_DIM), jnp.float32)
    eps = jax.random.normal(k_eps, (batch, Z_DIM), jnp.float32)

    mu, log_var, reconstruction = vae_forward(x, eps, packed)
    jax.block_until_ready((mu, log_var, reconstruction))

    assert mu.shape == (batch, Z_DIM)
    assert log_var.shape == (batch, Z_DIM)
    assert reconstruction.shape == (batch, INPUT_DIM)
    assert bool(jnp.all(jnp.isfinite(mu)))
    assert bool(jnp.all(jnp.isfinite(log_var)))
    assert bool(jnp.all((reconstruction >= 0.0) & (reconstruction <= 1.0)))

    mu_r, lv_r, rec_r = vae_reference(x, eps, params)
    assert bool(jnp.allclose(mu, mu_r, rtol=rtol, atol=atol)), "mu mismatch"
    assert bool(jnp.allclose(log_var, lv_r, rtol=rtol, atol=atol)), "log_var mismatch"
    assert bool(jnp.allclose(reconstruction, rec_r, rtol=rtol, atol=atol)), "recon mismatch"


if __name__ == "__main__":
    key = jax.random.PRNGKey(0)
    k_params, k_x1, k_eps1, k_x2, k_eps2 = jax.random.split(key, 5)

    params = init_params(k_params)
    packed = pack_params(params)

    # small primary check (batch = 8, single-block grid)
    _check(8, params, packed, k_x1, k_eps1)
    # secondary check exercising a multi-step grid + batch padding (batch = 300)
    _check(300, params, packed, k_x2, k_eps2)

    print("KERNEL_OK")
</pallas_src>

<mosaic_0001>
module attributes {stable_mosaic.version = 11 : i64} {
  func.func @_vae_kernel(%arg0: i32, %arg1: memref<120x128xf32, #tpu.memory_space<vmem>>, %arg2: memref<16x128xbf16, #tpu.memory_space<vmem>>, %arg3: memref<2x128xbf16, #tpu.memory_space<vmem>>, %arg4: memref<20x128xbf16, #tpu.memory_space<vmem>>) attributes {dimension_semantics = [#tpu.dimension_semantics<parallel>], iteration_bounds = array<i64: 1>, scalar_prefetch = 0 : i64, scratch_operands = 0 : i64, tpu.core_type = #tpu.core_type<tc>, window_params = [{pipeline_mode = #tpu.pipeline_mode<synchronous>, transform_indices = @transform_0, window_bounds = array<i64: 120, 128>}, {transform_indices = @transform_1, window_bounds = array<i64: 16, 128>}, {transform_indices = @transform_2, window_bounds = array<i64: 2, 128>}, {transform_indices = @transform_3, window_bounds = array<i64: 20, 128>}]} {
    %c0 = arith.constant 0 : index
    %c0_0 = arith.constant 0 : index
    %0 = vector.load %arg2[%c0, %c0_0] : memref<16x128xbf16, #tpu.memory_space<vmem>>, vector<16x128xbf16>
    %c0_1 = arith.constant 0 : index
    %c0_2 = arith.constant 0 : index
    %1 = vector.load %arg1[%c0_1, %c0_2] : memref<120x128xf32, #tpu.memory_space<vmem>>, vector<15x16xf32>
    %2 = arith.truncf %1 : vector<15x16xf32> to vector<15x16xbf16>
    %c104 = arith.constant 104 : index
    %c0_3 = arith.constant 0 : index
    %3 = vector.load %arg1[%c104, %c0_3] : memref<120x128xf32, #tpu.memory_space<vmem>>, vector<15x1xf32>
    %cst = arith.constant dense<0.000000e+00> : vector<15x128xf32>
    %4 = tpu.matmul %2, %0, %cst {dimension_numbers = #tpu.dot_dimension_numbers<[1], [0], [0], [1], [0, 0, 1, 1], [], []>} : vector<15x16xbf16>, vector<16x128xbf16>, vector<15x128xf32> -> vector<15x128xf32>
    %5 = vector.broadcast %3 : vector<15x1xf32> to vector<15x128xf32>
    %6 = arith.addf %4, %5 : vector<15x128xf32>
    %cst_4 = arith.constant 0.000000e+00 : f32
    %7 = vector.broadcast %cst_4 : f32 to vector<15x128xf32>
    %8 = arith.maximumf %6, %7 : vector<15x128xf32>
    %c16 = arith.constant 16 : index
    %c0_5 = arith.constant 0 : index
    %9 = vector.load %arg1[%c16, %c0_5] : memref<120x128xf32, #tpu.memory_space<vmem>>, vector<15x15xf32>
    %10 = arith.truncf %9 : vector<15x15xf32> to vector<15x15xbf16>
    %c104_6 = arith.constant 104 : index
    %c1 = arith.constant 1 : index
    %11 = vector.load %arg1[%c104_6, %c1] : memref<120x128xf32, #tpu.memory_space<vmem>>, vector<15x1xf32>
    %12 = arith.truncf %8 : vector<15x128xf32> to vector<15x128xbf16>
    %cst_7 = arith.constant dense<0.000000e+00> : vector<15x128xf32>
    %13 = tpu.matmul %10, %12, %cst_7 {dimension_numbers = #tpu.dot_dimension_numbers<[1], [0], [0], [1], [0, 0, 1, 1], [], []>} : vector<15x15xbf16>, vector<15x128xbf16>, vector<15x128xf32> -> vector<15x128xf32>
    %14 = vector.broadcast %11 : vector<15x1xf32> to vector<15x128xf32>
    %15 = arith.addf %13, %14 : vector<15x128xf32>
    %cst_8 = arith.constant 0.000000e+00 : f32
    %16 = vector.broadcast %cst_8 : f32 to vector<15x128xf32>
    %17 = arith.maximumf %15, %16 : vector<15x128xf32>
    %c32 = arith.constant 32 : index
    %c0_9 = arith.constant 0 : index
    %18 = vector.load %arg1[%c32, %c0_9] : memref<120x128xf32, #tpu.memory_space<vmem>>, vector<8x15xf32>
    %19 = arith.truncf %18 : vector<8x15xf32> to vector<8x15xbf16>
    %c104_10 = arith.constant 104 : index
    %c2 = arith.constant 2 : index
    %20 = vector.load %arg1[%c104_10, %c2] : memref<120x128xf32, #tpu.memory_space<vmem>>, vector<8x1xf32>
    %21 = arith.truncf %17 : vector<15x128xf32> to vector<15x128xbf16>
    %cst_11 = arith.constant dense<0.000000e+00> : vector<8x128xf32>
    %22 = tpu.matmul %19, %21, %cst_11 {dimension_numbers = #tpu.dot_dimension_numbers<[1], [0], [0], [1], [0, 0, 1, 1], [], []>} : vector<8x15xbf16>, vector<15x128xbf16>, vector<8x128xf32> -> vector<8x128xf32>
    %23 = vector.broadcast %20 : vector<8x1xf32> to vector<8x128xf32>
    %24 = arith.addf %22, %23 : vector<8x128xf32>
    %cst_12 = arith.constant 0.000000e+00 : f32
    %25 = vector.broadcast %cst_12 : f32 to vector<8x128xf32>
    %26 = arith.maximumf %24, %25 : vector<8x128xf32>
    %c40 = arith.constant 40 : index
    %c0_13 = arith.constant 0 : index
    %27 = vector.load %arg1[%c40, %c0_13] : memref<120x128xf32, #tpu.memory_space<vmem>>, vector<8x8xf32>
    %28 = arith.truncf %27 : vector<8x8xf32> to vector<8x8xbf16>
    %c104_14 = arith.constant 104 : index
    %c3 = arith.constant 3 : index
    %29 = vector.load %arg1[%c104_14, %c3] : memref<120x128xf32, #tpu.memory_space<vmem>>, vector<8x1xf32>
    %30 = arith.truncf %26 : vector<8x128xf32> to vector<8x128xbf16>
    %cst_15 = arith.constant dense<0.000000e+00> : vector<8x128xf32>
    %31 = tpu.matmul %28, %30, %cst_15 {dimension_numbers = #tpu.dot_dimension_numbers<[1], [0], [0], [1], [0, 0, 1, 1], [], []>} : vector<8x8xbf16>, vector<8x128xbf16>, vector<8x128xf32> -> vector<8x128xf32>
    %32 = vector.broadcast %29 : vector<8x1xf32> to vector<8x128xf32>
    %33 = arith.addf %31, %32 : vector<8x128xf32>
    %cst_16 = arith.constant 0.000000e+00 : f32
    %34 = vector.broadcast %cst_16 : f32 to vector<8x128xf32>
    %35 = arith.maximumf %33, %34 : vector<8x128xf32>
    %c48 = arith.constant 48 : index
    %c0_17 = arith.constant 0 : index
    %36 = vector.load %arg1[%c48, %c0_17] : memref<120x128xf32, #tpu.memory_space<vmem>>, vector<4x8xf32>
    %37 = arith.truncf %36 : vector<4x8xf32> to vector<4x8xbf16>
    %c104_18 = arith.constant 104 : index
    %c4 = arith.constant 4 : index
    %38 = vector.load %arg1[%c104_18, %c4] : memref<120x128xf32, #tpu.memory_space<vmem>>, vector<4x1xf32>
    %39 = arith.truncf %35 : vector<8x128xf32> to vector<8x128xbf16>
    %cst_19 = arith.constant dense<0.000000e+00> : vector<4x128xf32>
    %40 = tpu.matmul %37, %39, %cst_19 {dimension_numbers = #tpu.dot_dimension_numbers<[1], [0], [0], [1], [0, 0, 1, 1], [], []>} : vector<4x8xbf16>, vector<8x128xbf16>, vector<4x128xf32> -> vector<4x128xf32>
    %41 = vector.broadcast %38 : vector<4x1xf32> to vector<4x128xf32>
    %42 = arith.addf %40, %41 : vector<4x128xf32>
    %43 = vector.extract_strided_slice %42 {offsets = [0, 0], sizes = [2, 128], strides = [1, 1]} : vector<4x128xf32> to vector<2x128xf32>
    %44 = vector.extract_strided_slice %42 {offsets = [2, 0], sizes = [2, 128], strides = [1, 1]} : vector<4x128xf32> to vector<2x128xf32>
    %c0_20 = arith.constant 0 : index
    %c0_21 = arith.constant 0 : index
    %45 = vector.load %arg3[%c0_20, %c0_21] : memref<2x128xbf16, #tpu.memory_space<vmem>>, vector<2x128xbf16>
    %46 = arith.extf %45 : vector<2x128xbf16> to vector<2x128xf32>
    %cst_22 = arith.constant 5.000000e-01 : f32
    %47 = vector.broadcast %cst_22 : f32 to vector<2x128xf32>
    %48 = arith.mulf %47, %44 : vector<2x128xf32>
    %49 = math.exp %48 : vector<2x128xf32>
    %50 = arith.mulf %46, %49 : vector<2x128xf32>
    %51 = arith.addf %43, %50 : vector<2x128xf32>
    %c56 = arith.constant 56 : index
    %c0_23 = arith.constant 0 : index
    %52 = vector.load %arg1[%c56, %c0_23] : memref<120x128xf32, #tpu.memory_space<vmem>>, vector<8x2xf32>
    %53 = arith.truncf %52 : vector<8x2xf32> to vector<8x2xbf16>
    %c104_24 = arith.constant 104 : index
    %c5 = arith.constant 5 : index
    %54 = vector.load %arg1[%c104_24, %c5] : memref<120x128xf32, #tpu.memory_space<vmem>>, vector<8x1xf32>
    %55 = arith.truncf %51 : vector<2x128xf32> to vector<2x128xbf16>
    %cst_25 = arith.constant dense<0.000000e+00> : vector<8x128xf32>
    %56 = tpu.matmul %53, %55, %cst_25 {dimension_numbers = #tpu.dot_dimension_numbers<[1], [0], [0], [1], [0, 0, 1, 1], [], []>} : vector<8x2xbf16>, vector<2x128xbf16>, vector<8x128xf32> -> vector<8x128xf32>
    %57 = vector.broadcast %54 : vector<8x1xf32> to vector<8x128xf32>
    %58 = arith.addf %56, %57 : vector<8x128xf32>
    %cst_26 = arith.constant 0.000000e+00 : f32
    %59 = vector.broadcast %cst_26 : f32 to vector<8x128xf32>
    %60 = arith.maximumf %58, %59 : vector<8x128xf32>
    %c64 = arith.constant 64 : index
    %c0_27 = arith.constant 0 : index
    %61 = vector.load %arg1[%c64, %c0_27] : memref<120x128xf32, #tpu.memory_space<vmem>>, vector<8x8xf32>
    %62 = arith.truncf %61 : vector<8x8xf32> to vector<8x8xbf16>
    %c104_28 = arith.constant 104 : index
    %c6 = arith.constant 6 : index
    %63 = vector.load %arg1[%c104_28, %c6] : memref<120x128xf32, #tpu.memory_space<vmem>>, vector<8x1xf32>
    %64 = arith.truncf %60 : vector<8x128xf32> to vector<8x128xbf16>
    %cst_29 = arith.constant dense<0.000000e+00> : vector<8x128xf32>
    %65 = tpu.matmul %62, %64, %cst_29 {dimension_numbers = #tpu.dot_dimension_numbers<[1], [0], [0], [1], [0, 0, 1, 1], [], []>} : vector<8x8xbf16>, vector<8x128xbf16>, vector<8x128xf32> -> vector<8x128xf32>
    %66 = vector.broadcast %63 : vector<8x1xf32> to vector<8x128xf32>
    %67 = arith.addf %65, %66 : vector<8x128xf32>
    %cst_30 = arith.constant 0.000000e+00 : f32
    %68 = vector.broadcast %cst_30 : f32 to vector<8x128xf32>
    %69 = arith.maximumf %67, %68 : vector<8x128xf32>
    %c72 = arith.constant 72 : index
    %c0_31 = arith.constant 0 : index
    %70 = vector.load %arg1[%c72, %c0_31] : memref<120x128xf32, #tpu.memory_space<vmem>>, vector<15x8xf32>
    %71 = arith.truncf %70 : vector<15x8xf32> to vector<15x8xbf16>
    %c104_32 = arith.constant 104 : index
    %c7 = arith.constant 7 : index
    %72 = vector.load %arg1[%c104_32, %c7] : memref<120x128xf32, #tpu.memory_space<vmem>>, vector<15x1xf32>
    %73 = arith.truncf %69 : vector<8x128xf32> to vector<8x128xbf16>
    %cst_33 = arith.constant dense<0.000000e+00> : vector<15x128xf32>
    %74 = tpu.matmul %71, %73, %cst_33 {dimension_numbers = #tpu.dot_dimension_numbers<[1], [0], [0], [1], [0, 0, 1, 1], [], []>} : vector<15x8xbf16>, vector<8x128xbf16>, vector<15x128xf32> -> vector<15x128xf32>
    %75 = vector.broadcast %72 : vector<15x1xf32> to vector<15x128xf32>
    %76 = arith.addf %74, %75 : vector<15x128xf32>
    %cst_34 = arith.constant 0.000000e+00 : f32
    %77 = vector.broadcast %cst_34 : f32 to vector<15x128xf32>
    %78 = arith.maximumf %76, %77 : vector<15x128xf32>
    %c88 = arith.constant 88 : index
    %c0_35 = arith.constant 0 : index
    %79 = vector.load %arg1[%c88, %c0_35] : memref<120x128xf32, #tpu.memory_space<vmem>>, vector<16x15xf32>
    %80 = arith.truncf %79 : vector<16x15xf32> to vector<16x15xbf16>
    %c104_36 = arith.constant 104 : index
    %c8 = arith.constant 8 : index
    %81 = vector.load %arg1[%c104_36, %c8] : memref<120x128xf32, #tpu.memory_space<vmem>>, vector<16x1xf32>
    %82 = arith.truncf %78 : vector<15x128xf32> to vector<15x128xbf16>
    %cst_37 = arith.constant dense<0.000000e+00> : vector<16x128xf32>
    %83 = tpu.matmul %80, %82, %cst_37 {dimension_numbers = #tpu.dot_dimension_numbers<[1], [0], [0], [1], [0, 0, 1, 1], [], []>} : vector<16x15xbf16>, vector<15x128xbf16>, vector<16x128xf32> -> vector<16x128xf32>
    %84 = vector.broadcast %81 : vector<16x1xf32> to vector<16x128xf32>
    %85 = arith.addf %83, %84 : vector<16x128xf32>
    %cst_38 = arith.constant 5.000000e-01 : f32
    %86 = vector.broadcast %cst_38 : f32 to vector<16x128xf32>
    %87 = arith.mulf %86, %85 : vector<16x128xf32>
    %88 = math.tanh %87 : vector<16x128xf32>
    %cst_39 = arith.constant 5.000000e-01 : f32
    %89 = vector.broadcast %cst_39 : f32 to vector<16x128xf32>
    %90 = arith.mulf %89, %88 : vector<16x128xf32>
    %cst_40 = arith.constant 5.000000e-01 : f32
    %91 = vector.broadcast %cst_40 : f32 to vector<16x128xf32>
    %92 = arith.addf %90, %91 : vector<16x128xf32>
    %93 = arith.truncf %92 : vector<16x128xf32> to vector<16x128xbf16>
    %c0_41 = arith.constant 0 : index
    %c0_42 = arith.constant 0 : index
    %94 = vector.load %arg4[%c0_41, %c0_42] : memref<20x128xbf16, #tpu.memory_space<vmem>>, vector<16x128xbf16>
    tpu.vector_store %arg4[%c0_41, %c0_42], %93 {strides = array<i32>} : memref<20x128xbf16, #tpu.memory_space<vmem>>, vector<16x128xbf16>,
    %95 = arith.truncf %42 : vector<4x128xf32> to vector<4x128xbf16>
    %c16_43 = arith.constant 16 : index
    %c0_44 = arith.constant 0 : index
    %96 = vector.load %arg4[%c16_43, %c0_44] : memref<20x128xbf16, #tpu.memory_space<vmem>>, vector<4x128xbf16>
    tpu.vector_store %arg4[%c16_43, %c0_44], %95 {strides = array<i32>} : memref<20x128xbf16, #tpu.memory_space<vmem>>, vector<4x128xbf16>,
    return
  }
  func.func @transform_0(%arg0: i32) -> (i32, i32) {
    %c0_i32 = arith.constant 0 : i32
    %c0_i32_0 = arith.constant 0 : i32
    %c0_i32_1 = arith.constant 0 : i32
    return %c0_i32, %c0_i32_0 : i32, i32
  }
  func.func @transform_1(%arg0: i32) -> (i32, i32) {
    %c0_i32 = arith.constant 0 : i32
    %c0_i32_0 = arith.constant 0 : i32
    return %c0_i32, %arg0 : i32, i32
  }
  func.func @transform_2(%arg0: i32) -> (i32, i32) {
    %c0_i32 = arith.constant 0 : i32
    %c0_i32_0 = arith.constant 0 : i32
    return %c0_i32, %arg0 : i32, i32
  }
  func.func @transform_3(%arg0: i32) -> (i32, i32) {
    %c0_i32 = arith.constant 0 : i32
    %c0_i32_0 = arith.constant 0 : i32
    return %c0_i32, %arg0 : i32, i32
  }
}

</mosaic_0001>

<llo_original>
// kernel: vae_forward.1
$region0: #{vae_forward.1}
  #allocation0 [shape = 'u32[]', space=smem, size = 0x4, offset = 0x4, fixed_abs, tag = 'smem constant byte address 0x4 - core index']
  #allocation1 [shape = 'u32[72,128]{1,0:T(1,128)}', space=vmem, size = 0x9000, scoped, tag = 'internal scratch']
  %s0 = inlined_call_operand.hbm [shape: f32[120,128], index: 0, kind: input, shape index: {}]
  %s1 = inlined_call_operand.vmem [shape: bf16[16,128], index: 1, kind: input, shape index: {}]
  %s2 = inlined_call_operand.vmem [shape: bf16[2,128], index: 2, kind: input, shape index: {}]
  %s3 = inlined_call_operand.vmem [shape: bf16[20,128], index: 3, kind: output, shape index: {}]
  %s4 = sld [smem:[#allocation0]]
  $region26: #{vae_forward.1} parent=0
    _
  %s6 = ssub.s32 1, %s4
  %s7 = scalar_select 0, %s6, %s4
  $region1: #{vae_forward.1} parent=0
    #allocation2 [shape = 'u8[61440]{0}', space=vmem, size = 0xf000, scoped, tag = 'input window, operand 0, single buffered']
    #allocation3 [shape = 's32[1]{0}', space=sflag, size = 0x4, scoped, tag = 'scoped memory for vae_forward.1']
    %8 = vsyncpa [#allocation3], 0
    // Predicated region
    $region2: #{vae_forward.1} parent=1 // pred_check
      _
    $region3: #{vae_forward.1} parent=1 // pred_check_branch
      %10 = sbr.rel (0) target = $region5
    $region4: #{vae_forward.1} parent=1 // pred_region
      %12 = vsyncadd [#allocation3], 0
      %s13 = sshll.u32 %s0, 4
      %s14 = int_to_ptr.hbm [resolvable:$true] %s13
      %s15 = sshll.u32 [#allocation2], 4
      %s16 = int_to_ptr.vmem [resolvable:$true] %s15
      %21 = dma.hbm_to_vmem [thread:$0]  %s14, 1920, %s16, [#allocation3], 128, 128, 8
    $region5: #{vae_forward.1} parent=1 // pred_fallthru
      _
    // Predicated region
    $region6: #{vae_forward.1} parent=1 // pred_check
      _
    $region7: #{vae_forward.1} parent=1 // pred_check_branch
      %23 = sbr.rel (0) target = $region9
    $region8: #{vae_forward.1} parent=1 // pred_region
      _
    $region9: #{vae_forward.1} parent=1 // pred_fallthru
      _
    // Predicated region
    $region10: #{vae_forward.1} parent=1 // pred_check
      _
    $region11: #{vae_forward.1} parent=1 // pred_check_branch
      %25 = sbr.rel (0) target = $region13
    $region12: #{vae_forward.1} parent=1 // pred_region
      _
    $region13: #{vae_forward.1} parent=1 // pred_fallthru
      _
    // Predicated region
    $region14: #{vae_forward.1} parent=1 // pred_check
      _
    $region15: #{vae_forward.1} parent=1 // pred_check_branch
      %27 = sbr.rel (0) target = $region17
    $region16: #{vae_forward.1} parent=1 // pred_region
      %29 = dma.done [#allocation3], 1920
    $region17: #{vae_forward.1} parent=1 // pred_fallthru
      _
    %v31 = vld [vmem:[%s1] sm:$0xf]
    %v32 = vld [vmem:[%s1 + $0x4] sm:$0xf]
    %v33 = vld [vmem:[#allocation2] sm:$0xff]
    %v34 = vld [vmem:[#allocation2 + $0x8] sm:$0x7f]
    %v35 = vpack.c.bf16 %v34, %v33
    %v36 = vld [vmem:[#allocation2 + $0x68] sm:$0xff]
    %v37 = vld [vmem:[#allocation2 + $0x70] sm:$0x7f]
    %39 = vset.pattern.permute.xlu0 0
    %40 = vperm.xlu0 %39, %v36
    %v41 = vpop.permute.xlu0 %40
    %44 = vset.pattern.permute.xlu0 0
    %45 = vperm.xlu0 %44, %v37
    %v46 = vpop.permute.xlu0 %45
    %v50 = vunpack.c.l.b16 %v31
    %v51 = vunpack.c.l.b16 %v32
    %v52 = vpack.c.b16 %v51, %v50
    %vm54 = vcmask 130048
    %v56 = vsel %vm54, %v35, 0
    %58 = vmatpush.bf16.msra.mxu0 0
    %59 = vmatpush.bf16.msra.mxu0 0
    %60 = vmatpush.bf16.msra.mxu0 0
    %61 = vmatpush.bf16.msra.mxu0 0
    %62 = vmatpush.bf16.msra.mxu0 0
    %63 = vmatpush.bf16.msra.mxu0 0
    %64 = vmatpush.bf16.msra.mxu0 0
    %65 = vmatpush.bf16.msra.mxu0 %v52
    %66 = vmatmul.bf16.gmra.mxu0 %v56
    %v67 = vpop.f32.mrf.mxu0
    %v68 = vadd.f32 %v41, %v67
    %v69 = vpop.f32.mrf.mxu0
    %v70 = vadd.f32 %v46, %v69
    %71 = vdwg.mxu0
    %v72 = vmax.f32 %v68, 0.0
    %v73 = vmax.f32 %v70, 0.0
    %v74 = vld [vmem:[#allocation2 + $0x10] sm:$0xff]
    %v75 = vld [vmem:[#allocation2 + $0x18] sm:$0x7f]
    %v76 = vpack.c.bf16 %v75, %v74
    %v77 = vpack.c.bf16 %v73, %v72
    %78 = vset.pattern.permute.xlu0 1
    %79 = vperm.xlu0 %78, %v36
    %v80 = vpop.permute.xlu0 %79
    %82 = vset.pattern.permute.xlu0 1
    %83 = vperm.xlu0 %82, %v37
    %v84 = vpop.permute.xlu0 %83
    %vm86 = vcmask 121856
    %v88 = vsel %vm86, %v76, 0
    %vm90 = vcmask 1046528
    %vm91 = vcmask 1047552
    %v92 = vsel %vm90, 4294967295, 65535
    %v93 = vsel %vm91, %v92, 0
    %v95 = vand.u32 %v77, %v93
    %97 = vmatpush.bf16.msra.mxu0 0
    %98 = vmatpush.bf16.msra.mxu0 0
    %99 = vmatpush.bf16.msra.mxu0 0
    %100 = vmatpush.bf16.msra.mxu0 0
    %101 = vmatpush.bf16.msra.mxu0 0
    %102 = vmatpush.bf16.msra.mxu0 0
    %103 = vmatpush.bf16.msra.mxu0 0
    %104 = vmatpush.bf16.msra.mxu0 %v95
    %105 = vmatmul.bf16.gmra.mxu0 %v88
    %v106 = vpop.f32.mrf.mxu0
    %v107 = vadd.f32 %v80, %v106
    %v108 = vpop.f32.mrf.mxu0
    %v109 = vadd.f32 %v84, %v108
    %110 = vdwg.mxu0
    %v111 = vmax.f32 %v107, 0.0
    %v112 = vmax.f32 %v109, 0.0
    %v113 = vld [vmem:[#allocation2 + $0x20] sm:$0xff]
    %v114 = vpack.c.bf16 %v113, %v113
    %v115 = vld [vmem:[#allocation2 + $0x68] sm:$0xff]
    %v116 = vpack.c.bf16 %v112, %v111
    %118 = vset.pattern.permute.xlu0 2
    %119 = vperm.xlu0 %118, %v115
    %v120 = vpop.permute.xlu0 %119
    %v123 = vsel %vm86, %v114, 0
    %v126 = vand.u32 %v116, %v93
    %128 = vmatpush.bf16.msra.mxu0 0
    %129 = vmatpush.bf16.msra.mxu0 0
    %130 = vmatpush.bf16.msra.mxu0 0
    %131 = vmatpush.bf16.msra.mxu0 0
    %132 = vmatpush.bf16.msra.mxu0 0
    %133 = vmatpush.bf16.msra.mxu0 0
    %134 = vmatpush.bf16.msra.mxu0 0
    %135 = vmatpush.bf16.msra.mxu0 %v126
    %136 = vmatmul.bf16.gmra.mxu0 %v123
    %v137 = vpop.f32.mrf.mxu0
    %v138 = vadd.f32 %v120, %v137
    %v139 = vpop.f32.mrf.mxu0
    %140 = vdwg.mxu0
    %v141 = vmax.f32 %v138, 0.0
    %v142 = vld [vmem:[#allocation2 + $0x28] sm:$0xff]
    %v143 = vpack.c.bf16 %v142, %v142
    %v144 = vpack.c.bf16 %v141, %v141
    %145 = vset.pattern.permute.xlu0 3
    %146 = vperm.xlu0 %145, %v115
    %v147 = vpop.permute.xlu0 %146
    %vm149 = vcmask 64512
    %v151 = vsel %vm149, %v143, 0
    %vm153 = vcmask 1043456
    %v155 = vsel %vm153, %v144, 0
    %157 = vmatpush.bf16.msra.mxu0 0
    %158 = vmatpush.bf16.msra.mxu0 0
    %159 = vmatpush.bf16.msra.mxu0 0
    %160 = vmatpush.bf16.msra.mxu0 0
    %161 = vmatpush.bf16.msra.mxu0 0
    %162 = vmatpush.bf16.msra.mxu0 0
    %163 = vmatpush.bf16.msra.mxu0 0
    %164 = vmatpush.bf16.msra.mxu0 %v155
    %165 = vmatmul.bf16.gmra.mxu0 %v151
    %v166 = vpop.f32.mrf.mxu0
    %v167 = vadd.f32 %v147, %v166
    %v168 = vpop.f32.mrf.mxu0
    %169 = vdwg.mxu0
    %v170 = vmax.f32 %v167, 0.0
    %v171 = vld [vmem:[#allocation2 + $0x30] sm:$0xf]
    %v172 = vpack.c.bf16 %v171, %v171
    %v173 = vld [vmem:[#allocation2 + $0x68] sm:$0xf]
    %v174 = vpack.c.bf16 %v170, %v170
    %176 = vset.pattern.permute.xlu0 4
    %177 = vperm.xlu0 %176, %v173
    %v178 = vpop.permute.xlu0 %177
    %v181 = vsel %vm149, %v172, 0
    %v184 = vsel %vm153, %v174, 0
    %186 = vmatpush.bf16.msra.mxu0 0
    %187 = vmatpush.bf16.msra.mxu0 0
    %188 = vmatpush.bf16.msra.mxu0 0
    %189 = vmatpush.bf16.msra.mxu0 0
    %190 = vmatpush.bf16.msra.mxu0 0
    %191 = vmatpush.bf16.msra.mxu0 0
    %192 = vmatpush.bf16.msra.mxu0 0
    %193 = vmatpush.bf16.msra.mxu0 %v184
    %194 = vmatmul.bf16.gmra.mxu0 %v181
    %v195 = vpop.f32.mrf.mxu0
    %v196 = vadd.f32 %v178, %v195
    %v197 = vpop.f32.mrf.mxu0
    %198 = vdwg.mxu0
    %v199 = vld [vmem:[%s2] sm:$0x1]
    %v200 = vunpack.c.l.bf16 %v199
    %v201 = vmul.f32 %v196, 0.5
    %v202 = vmul.f32 %v201, 1.442695
    %v203 = vpow.pop %v202
    %205 = vst.sshfl [vmem:[#allocation1] sm:$0xff pattern:$0x73625140] %v203
    %s206 = scalar_lea.vmem [#allocation1], 1
    %v207 = vld [vmem:[%s206] ss:$4 sm:$0xff]
    %v209 = vmul.f32 %v200, %v207
    %v210 = vadd.f32 %v196, %v209
    %v211 = vld [vmem:[#allocation2 + $0x38] sm:$0xff]
    %v212 = vpack.c.bf16 %v211, %v211
    %v213 = vld [vmem:[#allocation2 + $0x68] sm:$0xff]
    %v214 = vpack.c.bf16 %v210, %v210
    %216 = vset.pattern.permute.xlu0 5
    %217 = vperm.xlu0 %216, %v213
    %v218 = vpop.permute.xlu0 %217
    %vm220 = vcmask 15360
    %v222 = vsel %vm220, %v212, 0
    %vm224 = vcmask 1040384
    %v226 = vsel %vm224, %v214, 0
    %228 = vmatpush.bf16.msra.mxu0 0
    %229 = vmatpush.bf16.msra.mxu0 0
    %230 = vmatpush.bf16.msra.mxu0 0
    %231 = vmatpush.bf16.msra.mxu0 0
    %232 = vmatpush.bf16.msra.mxu0 0
    %233 = vmatpush.bf16.msra.mxu0 0
    %234 = vmatpush.bf16.msra.mxu0 0
    %235 = vmatpush.bf16.msra.mxu0 %v226
    %236 = vmatmul.bf16.gmra.mxu0 %v222
    %v237 = vpop.f32.mrf.mxu0
    %v238 = vadd.f32 %v218, %v237
    %v239 = vpop.f32.mrf.mxu0
    %240 = vdwg.mxu0
    %v241 = vmax.f32 %v238, 0.0
    %v242 = vld [vmem:[#allocation2 + $0x40] sm:$0xff]
    %v243 = vpack.c.bf16 %v242, %v242
    %v244 = vpack.c.bf16 %v241, %v241
    %245 = vset.pattern.permute.xlu0 6
    %246 = vperm.xlu0 %245, %v213
    %v247 = vpop.permute.xlu0 %246
    %v250 = vsel %vm149, %v243, 0
    %v253 = vsel %vm153, %v244, 0
    %255 = vmatpush.bf16.msra.mxu0 0
    %256 = vmatpush.bf16.msra.mxu0 0
    %257 = vmatpush.bf16.msra.mxu0 0
    %258 = vmatpush.bf16.msra.mxu0 0
    %259 = vmatpush.bf16.msra.mxu0 0
    %260 = vmatpush.bf16.msra.mxu0 0
    %261 = vmatpush.bf16.msra.mxu0 0
    %262 = vmatpush.bf16.msra.mxu0 %v253
    %263 = vmatmul.bf16.gmra.mxu0 %v250
    %v264 = vpop.f32.mrf.mxu0
    %v265 = vadd.f32 %v247, %v264
    %v266 = vpop.f32.mrf.mxu0
    %267 = vdwg.mxu0
    %v268 = vmax.f32 %v265, 0.0
    %v269 = vld [vmem:[#allocation2 + $0x48] sm:$0xff]
    %v270 = vld [vmem:[#allocation2 + $0x50] sm:$0x7f]
    %v271 = vpack.c.bf16 %v270, %v269
    %v272 = vld [vmem:[#allocation2 + $0x68] sm:$0xff]
    %v273 = vld [vmem:[#allocation2 + $0x70] sm:$0x7f]
    %v274 = vpack.c.bf16 %v268, %v268
    %276 = vset.pattern.permute.xlu0 7
    %277 = vperm.xlu0 %276, %v272
    %v278 = vpop.permute.xlu0 %277
    %281 = vset.pattern.permute.xlu0 7
    %282 = vperm.xlu0 %281, %v273
    %v283 = vpop.permute.xlu0 %282
    %v286 = vsel %vm149, %v271, 0
    %v289 = vsel %vm153, %v274, 0
    %291 = vmatpush.bf16.msra.mxu0 0
    %292 = vmatpush.bf16.msra.mxu0 0
    %293 = vmatpush.bf16.msra.mxu0 0
    %294 = vmatpush.bf16.msra.mxu0 0
    %295 = vmatpush.bf16.msra.mxu0 0
    %296 = vmatpush.bf16.msra.mxu0 0
    %297 = vmatpush.bf16.msra.mxu0 0
    %298 = vmatpush.bf16.msra.mxu0 %v289
    %299 = vmatmul.bf16.gmra.mxu0 %v286
    %v300 = vpop.f32.mrf.mxu0
    %v301 = vadd.f32 %v278, %v300
    %v302 = vpop.f32.mrf.mxu0
    %v303 = vadd.f32 %v283, %v302
    %304 = vdwg.mxu0
    %v305 = vmax.f32 %v301, 0.0
    %v306 = vmax.f32 %v303, 0.0
    %v307 = vld [vmem:[#allocation2 + $0x58] sm:$0xff]
    %v308 = vld [vmem:[#allocation2 + $0x60] sm:$0xff]
    %v309 = vpack.c.bf16 %v308, %v307
    %v310 = vld [vmem:[#allocation2 + $0x68] sm:$0xff]
    %v311 = vld [vmem:[#allocation2 + $0x70] sm:$0xff]
    %v312 = vpack.c.bf16 %v306, %v305
    %314 = vset.pattern.permute.xlu0 8
    %315 = vperm.xlu0 %314, %v310
    %v316 = vpop.permute.xlu0 %315
    %319 = vset.pattern.permute.xlu0 8
    %320 = vperm.xlu0 %319, %v311
    %v321 = vpop.permute.xlu0 %320
    %v324 = vsel %vm86, %v309, 0
    %v327 = vand.u32 %v312, %v93
    %329 = vmatpush.bf16.msra.mxu0 0
    %330 = vmatpush.bf16.msra.mxu0 0
    %331 = vmatpush.bf16.msra.mxu0 0
    %332 = vmatpush.bf16.msra.mxu0 0
    %333 = vmatpush.bf16.msra.mxu0 0
    %334 = vmatpush.bf16.msra.mxu0 0
    %335 = vmatpush.bf16.msra.mxu0 0
    %336 = vmatpush.bf16.msra.mxu0 %v327
    %337 = vmatmul.bf16.gmra.mxu0 %v324
    %v338 = vpop.f32.mrf.mxu0
    %v339 = vadd.f32 %v316, %v338
    %v340 = vpop.f32.mrf.mxu0
    %v341 = vadd.f32 %v321, %v340
    %342 = vdwg.mxu0
    %v343 = vmul.f32 %v339, 0.5
    %v344 = vmul.f32 %v341, 0.5
    %v345 = vtanh.pop %v343
    %v346 = vtanh.pop %v344
    %v347 = vmul.f32 %v345, 0.5
    %v348 = vmul.f32 %v346, 0.5
    %v349 = vadd.f32 %v347, 0.5
    %v350 = vadd.f32 %v348, 0.5
    %v351 = vpack.c.bf16 %v349, %v349
    %v352 = vpack.c.bf16 %v350, %v350
    %353 = vst [vmem:[%s3] sm:$0xf] %v351
    %354 = vst [vmem:[%s3 + $0x4] sm:$0xf] %v352
    %v355 = vpack.c.bf16 %v196, %v196
    %356 = vst [vmem:[%s3 + $0x8] sm:$0x3] %v355
    // Predicated region
    $region18: #{vae_forward.1} parent=1 // pred_check
      _
    $region19: #{vae_forward.1} parent=1 // pred_check_branch
      %358 = sbr.rel (0) target = $region21
    $region20: #{vae_forward.1} parent=1 // pred_region
      _
    $region21: #{vae_forward.1} parent=1 // pred_fallthru
      _
    // Predicated region
    $region22: #{vae_forward.1} parent=1 // pred_check
      _
    $region23: #{vae_forward.1} parent=1 // pred_check_branch
      %360 = sbr.rel (0) target = $region25
    $region24: #{vae_forward.1} parent=1 // pred_region
      _
    $region25: #{vae_forward.1} parent=1 // pred_fallthru
      _
    %361 = vsyncpa [#allocation3], 1

</llo_original>
